<compile_context>
chip_gen: v6e
topology: v6e:2x2x1
jax: 0.10.0
libtpu: 0.0.40
codegen_flags: <defaults>
</compile_context>

<pallas_src>
import functools
import math

import jax
import jax.numpy as jnp
from jax.experimental import pallas as pl
from jax.experimental.pallas import tpu as pltpu


def make_rope_tables(theta: float, d_k: int, max_seq_len: int,
                     dtype=jnp.float32):
    """Equivalent of RotaryPositionalEmbedding.__init__ buffers (pre-expanded)."""
    positions = jnp.arange(max_seq_len, dtype=jnp.float32)[:, None]   # (L, 1)
    freqs = jnp.arange(0, d_k, 2, dtype=jnp.float32) / d_k            # (d_k//2,)
    inv_freq = 1.0 / (theta ** freqs)
    angles = positions * inv_freq                                     # (L, d_k//2)
    cos = jnp.cos(angles)
    sin = jnp.sin(angles)
    # Interleave-expand to full d_k width, folding in the RoPE sign pattern.
    cos_full = jnp.repeat(cos, 2, axis=-1)                            # [c, c, ...]
    sin_full = jnp.stack([-sin, sin], axis=-1).reshape(max_seq_len, d_k)
    return cos_full.astype(dtype), sin_full.astype(dtype)


def _rope_kernel(x_ref, cos_ref, sin_ref, o_ref):
    x = x_ref[...].astype(jnp.float32)        # (T, W)
    c = cos_ref[...].astype(jnp.float32)      # (T, W)  [c0, c0, c1, c1, ...]
    s = sin_ref[...].astype(jnp.float32)      # (T, W)  [-s0, +s0, -s1, +s1, ...]
    t_rows, w = x.shape

    # pair_swap(x)[:, 2i] = x[:, 2i+1] ; pair_swap(x)[:, 2i+1] = x[:, 2i]
    # Two opposite unit lane rotations (XLU) + parity select.  The mask comes
    # from rotating a lane-index iota with the SAME roll call, so this is
    # correct for either rotation-direction convention and for any even W.
    lane = jax.lax.broadcasted_iota(jnp.int32, (t_rows, w), 1)
    partner = lane ^ 1
    r_fwd = pltpu.roll(x, shift=1, axis=1)
    r_bwd = pltpu.roll(x, shift=w - 1, axis=1)
    i_fwd = pltpu.roll(lane, shift=1, axis=1)
    x_pair = jnp.where(i_fwd == partner, r_fwd, r_bwd)

    o_ref[...] = (x * c + x_pair * s).astype(o_ref.dtype)


def _pick_tile_rows(rows: int, width: int, itemsize: int) -> int:
    """Row-tile heuristic: ~2 MiB x-blocks, multiple of the dtype sublane pack."""
    sublane = max(8, 32 // max(1, itemsize))      # 8 f32, 16 bf16, 32 int8/fp8
    target_block_bytes = 2 << 20                  # x+cos+sin+out, double-buffered
    t = target_block_bytes // max(1, width * itemsize)   #   -> ~16 MiB resident
    t = max(sublane, min(int(t), 4096))
    t = (t // sublane) * sublane
    rows_up = ((rows + sublane - 1) // sublane) * sublane
    return max(sublane, min(t, rows_up))


@functools.partial(jax.jit, static_argnames=("tile_rows",))
def rope_pallas(x, token_positions, cos_full, sin_full, *, tile_rows=None):
    """Interleaved RoPE: x (..., d_k), token_positions broadcastable to x.shape[:-1]."""
    d_k = x.shape[-1]
    assert d_k % 2 == 0, "d_k must be even for RoPE"
    assert cos_full.shape[-1] == d_k and sin_full.shape[-1] == d_k

    token_positions = jnp.asarray(token_positions)

    # torch-style broadcasting of token_positions against x's leading dims.
    lead = jnp.broadcast_shapes(x.shape[:-1], token_positions.shape)
    x_b = jnp.broadcast_to(x, lead + (d_k,))
    tp_b = jnp.broadcast_to(token_positions, lead)

    rows = 1
    for n in lead:
        rows *= n
    x2d = x_b.reshape(rows, d_k)
    pos = tp_b.reshape(rows)

    # Per-row cos/sin gather (full-width, sign pattern pre-applied).  Cast to
    # x.dtype so low-precision inputs stream half the bytes through the kernel.
    cos_b = cos_full[pos].astype(x.dtype)          # (rows, d_k)
    sin_b = sin_full[pos].astype(x.dtype)          # (rows, d_k)

    # Lane packing: fuse g rows into the lane axis so the block's last dim is a
    # multiple of 128 (unmasked stores when d_k < 128).  Metadata-only reshape.
    g = 128 // math.gcd(d_k, 128)
    if g <= 1 or rows % g != 0:
        g = 1
    width = g * d_k
    n_rows = rows // g
    x2d = x2d.reshape(n_rows, width)
    cos_b = cos_b.reshape(n_rows, width)
    sin_b = sin_b.reshape(n_rows, width)

    if tile_rows is None:
        tile_rows = _pick_tile_rows(n_rows, width, jnp.dtype(x.dtype).itemsize)

    grid = (pl.cdiv(n_rows, tile_rows),)            # ragged last block, no padding
    row_spec = pl.BlockSpec((tile_rows, width), lambda i: (i, 0))

    out2d = pl.pallas_call(
        _rope_kernel,
        out_shape=jax.ShapeDtypeStruct((n_rows, width), x.dtype),
        grid_spec=pltpu.PrefetchScalarGridSpec(
            num_scalar_prefetch=0,
            grid=grid,
            in_specs=[row_spec, row_spec, row_spec],
            out_specs=row_spec,
        ),
        compiler_params=pltpu.CompilerParams(
            dimension_semantics=("parallel",),
            vmem_limit_bytes=32 * 1024 * 1024),
    )(x2d, cos_b, sin_b)

    return out2d.reshape(lead + (d_k,))


def rope_ref(x, token_positions, theta, d_k, max_seq_len):
    """Pure-JAX mirror of the PyTorch module forward."""
    positions = jnp.arange(max_seq_len, dtype=jnp.float32)[:, None]
    freqs = jnp.arange(0, d_k, 2, dtype=jnp.float32) / d_k
    inv_freq = 1.0 / (theta ** freqs)
    angles = positions * inv_freq
    cos = jnp.cos(angles)
    sin = jnp.sin(angles)
    cos_pos = cos[token_positions]
    sin_pos = sin[token_positions]
    x_even = x[..., 0::2]
    x_odd = x[..., 1::2]
    r_even = x_even * cos_pos - x_odd * sin_pos
    r_odd = x_even * sin_pos + x_odd * cos_pos
    out = jnp.stack([r_even, r_odd], axis=-1)
    return out.reshape(out.shape[:-2] + (d_k,)).astype(x.dtype)


if __name__ == "__main__":
    key = jax.random.PRNGKey(0)
    max_seq_len, theta = 64, 10000.0

    # Case 1: d_k = 128 (lane-aligned path, g = 1).
    batch, seq, d_k = 2, 8, 128
    x = jax.random.normal(key, (batch, seq, d_k), dtype=jnp.float32)
    token_positions = jnp.array([3, 1, 4, 15, 9, 2, 6, 53], dtype=jnp.int32)

    cos_full, sin_full = make_rope_tables(theta, d_k, max_seq_len)
    out = jax.block_until_ready(rope_pallas(x, token_positions, cos_full, sin_full))
    ref = rope_ref(x, token_positions, theta, d_k, max_seq_len)
    assert out.shape == ref.shape == (batch, seq, d_k)
    assert out.dtype == x.dtype
    assert jnp.allclose(out, ref, atol=1e-5, rtol=1e-5), "mismatch vs reference (d_k=128)"

    # Case 2: d_k = 64 (lane-packing path, g = 2 -> 128-wide blocks).
    d_k2 = 64
    key2 = jax.random.PRNGKey(0)
    x2 = jax.random.normal(key2, (batch, seq, d_k2), dtype=jnp.float32)
    cos2, sin2 = make_rope_tables(theta, d_k2, max_seq_len)
    out2 = jax.block_until_ready(rope_pallas(x2, token_positions, cos2, sin2))
    ref2 = rope_ref(x2, token_positions, theta, d_k2, max_seq_len)
    assert out2.shape == ref2.shape == (batch, seq, d_k2)
    assert jnp.allclose(out2, ref2, atol=1e-5, rtol=1e-5), "mismatch vs reference (d_k=64)"

    print("KERNEL_OK")
</pallas_src>

<mosaic_0001>
module attributes {stable_mosaic.version = 11 : i64} {
  func.func @_rope_kernel(%arg0: i32, %arg1: memref<16x128xf32, #tpu.memory_space<vmem>>, %arg2: memref<16x128xf32, #tpu.memory_space<vmem>>, %arg3: memref<16x128xf32, #tpu.memory_space<vmem>>, %arg4: memref<16x128xf32, #tpu.memory_space<vmem>>) attributes {dimension_semantics = [#tpu.dimension_semantics<parallel>], iteration_bounds = array<i64: 1>, scalar_prefetch = 0 : i64, scratch_operands = 0 : i64, tpu.core_type = #tpu.core_type<tc>, window_params = [{transform_indices = @transform_0, window_bounds = array<i64: 16, 128>}, {transform_indices = @transform_1, window_bounds = array<i64: 16, 128>}, {transform_indices = @transform_2, window_bounds = array<i64: 16, 128>}, {transform_indices = @transform_3, window_bounds = array<i64: 16, 128>}]} {
    %c0 = arith.constant 0 : index
    %c0_0 = arith.constant 0 : index
    %0 = vector.load %arg1[%c0, %c0_0] : memref<16x128xf32, #tpu.memory_space<vmem>>, vector<16x128xf32>
    %c0_1 = arith.constant 0 : index
    %c0_2 = arith.constant 0 : index
    %1 = vector.load %arg2[%c0_1, %c0_2] : memref<16x128xf32, #tpu.memory_space<vmem>>, vector<16x128xf32>
    %c0_3 = arith.constant 0 : index
    %c0_4 = arith.constant 0 : index
    %2 = vector.load %arg3[%c0_3, %c0_4] : memref<16x128xf32, #tpu.memory_space<vmem>>, vector<16x128xf32>
    %3 = tpu.iota {dimensions = array<i32: 1>} : vector<16x128xi32>
    %c1_i32 = arith.constant 1 : i32
    %4 = vector.broadcast %c1_i32 : i32 to vector<16x128xi32>
    %5 = arith.xori %3, %4 : vector<16x128xi32>
    %c1_i32_5 = arith.constant 1 : i32
    %6 = tpu.dynamic_rotate %0 by %c1_i32_5 dim 1 : vector<16x128xf32>, i32 -> vector<16x128xf32>
    %c127_i32 = arith.constant 127 : i32
    %7 = tpu.dynamic_rotate %0 by %c127_i32 dim 1 : vector<16x128xf32>, i32 -> vector<16x128xf32>
    %c1_i32_6 = arith.constant 1 : i32
    %8 = tpu.dynamic_rotate %3 by %c1_i32_6 dim 1 : vector<16x128xi32>, i32 -> vector<16x128xi32>
    %9 = arith.cmpi eq, %8, %5 : vector<16x128xi32>
    %10 = arith.select %9, %6, %7 : vector<16x128xi1>, vector<16x128xf32>
    %11 = arith.mulf %0, %1 : vector<16x128xf32>
    %12 = arith.mulf %10, %2 : vector<16x128xf32>
    %13 = arith.addf %11, %12 : vector<16x128xf32>
    %c0_7 = arith.constant 0 : index
    %c0_8 = arith.constant 0 : index
    %14 = vector.load %arg4[%c0_7, %c0_8] : memref<16x128xf32, #tpu.memory_space<vmem>>, vector<16x128xf32>
    tpu.vector_store %arg4[%c0_7, %c0_8], %13 {strides = array<i32>} : memref<16x128xf32, #tpu.memory_space<vmem>>, vector<16x128xf32>,
    return
  }
  func.func @transform_0(%arg0: i32) -> (i32, i32) {
    %c0_i32 = arith.constant 0 : i32
    %c0_i32_0 = arith.constant 0 : i32
    return %arg0, %c0_i32 : i32, i32
  }
  func.func @transform_1(%arg0: i32) -> (i32, i32) {
    %c0_i32 = arith.constant 0 : i32
    %c0_i32_0 = arith.constant 0 : i32
    return %arg0, %c0_i32 : i32, i32
  }
  func.func @transform_2(%arg0: i32) -> (i32, i32) {
    %c0_i32 = arith.constant 0 : i32
    %c0_i32_0 = arith.constant 0 : i32
    return %arg0, %c0_i32 : i32, i32
  }
  func.func @transform_3(%arg0: i32) -> (i32, i32) {
    %c0_i32 = arith.constant 0 : i32
    %c0_i32_0 = arith.constant 0 : i32
    return %arg0, %c0_i32 : i32, i32
  }
}

</mosaic_0001>

<llo_original>
// kernel: rope_pallas.1
$region0: #{rope_pallas.1}
  #allocation0 [shape = 'u32[]', space=smem, size = 0x4, offset = 0x4, fixed_abs, tag = 'smem constant byte address 0x4 - core index']
  #allocation1 [shape = 'u32[144,128]{1,0:T(1,128)}', space=vmem, size = 0x12000, scoped, tag = 'internal scratch']
  %s0 = inlined_call_operand.vmem [shape: f32[16,128], index: 0, kind: input, shape index: {}]
  %s1 = inlined_call_operand.vmem [shape: f32[16,128], index: 1, kind: input, shape index: {}]
  %s2 = inlined_call_operand.vmem [shape: f32[16,128], index: 2, kind: input, shape index: {}]
  %s3 = inlined_call_operand.hbm [shape: f32[16,128], index: 3, kind: output, shape index: {}]
  %s4 = sld [smem:[#allocation0]]
  $region22: #{rope_pallas.1} parent=0
    _
  %s6 = ssub.s32 1, %s4
  %s7 = scalar_select 0, %s6, %s4
  $region1: #{rope_pallas.1} parent=0
    #allocation2 [shape = 'u8[8192]{0}', space=vmem, size = 0x2000, scoped, tag = 'output window, operand 0, single buffered']
    #allocation3 [shape = 's32[1]{0}', space=sflag, size = 0x4, scoped, tag = 'scoped memory for rope_pallas.1']
    %8 = vsyncpa [#allocation3], 0
    // Predicated region
    $region2: #{rope_pallas.1} parent=1 // pred_check
      _
    $region3: #{rope_pallas.1} parent=1 // pred_check_branch
      %10 = sbr.rel (0) target = $region5
    $region4: #{rope_pallas.1} parent=1 // pred_region
      _
    $region5: #{rope_pallas.1} parent=1 // pred_fallthru
      _
    // Predicated region
    $region6: #{rope_pallas.1} parent=1 // pred_check
      _
    $region7: #{rope_pallas.1} parent=1 // pred_check_branch
      %12 = sbr.rel (0) target = $region9
    $region8: #{rope_pallas.1} parent=1 // pred_region
      _
    $region9: #{rope_pallas.1} parent=1 // pred_fallthru
      _
    // Predicated region
    $region10: #{rope_pallas.1} parent=1 // pred_check
      _
    $region11: #{rope_pallas.1} parent=1 // pred_check_branch
      %14 = sbr.rel (0) target = $region13
    $region12: #{rope_pallas.1} parent=1 // pred_region
      _
    $region13: #{rope_pallas.1} parent=1 // pred_fallthru
      _
    %v15 = vld [vmem:[%s0] sm:$0xff]
    %v16 = vld [vmem:[%s0 + $0x8] sm:$0xff]
    %v17 = vld [vmem:[%s1] sm:$0xff]
    %v18 = vld [vmem:[%s1 + $0x8] sm:$0xff]
    %v19 = vld [vmem:[%s2] sm:$0xff]
    %v20 = vld [vmem:[%s2 + $0x8] sm:$0xff]
    %v21 = vlaneseq
    %v22 = vand.u32 %v21, 127
    %v23 = vxor.u32 %v22, 1
    %24 = vrot.lane.b32.xlu0 %v15, 1
    %v25 = vpop.permute.xlu0 %24
    %26 = vrot.lane.b32.xlu0 %v16, 1
    %v27 = vpop.permute.xlu0 %26
    %28 = vrot.lane.b32.xlu0 %v15, 127
    %v29 = vpop.permute.xlu0 %28
    %30 = vrot.lane.b32.xlu0 %v16, 127
    %v31 = vpop.permute.xlu0 %30
    %32 = vrot.lane.b32.xlu0 %v22, 1
    %v33 = vpop.permute.xlu0 %32
    %vm34 = vcmp.eq.s32.totalorder %v33, %v23
    %v35 = vsel %vm34, %v25, %v29
    %v36 = vsel %vm34, %v27, %v31
    %v37 = vmul.f32 %v15, %v17
    %v38 = vmul.f32 %v16, %v18
    %v39 = vmul.f32 %v35, %v19
    %v40 = vmul.f32 %v36, %v20
    %v41 = vadd.f32 %v37, %v39
    %v42 = vadd.f32 %v38, %v40
    %43 = vst [vmem:[#allocation2] sm:$0xff] %v41
    %44 = vst [vmem:[#allocation2 + $0x8] sm:$0xff] %v42
    // Predicated region
    $region14: #{rope_pallas.1} parent=1 // pred_check
      _
    $region15: #{rope_pallas.1} parent=1 // pred_check_branch
      %46 = sbr.rel (0) target = $region17
    $region16: #{rope_pallas.1} parent=1 // pred_region
      %s48 = ssub.s32 256, 256
      %49 = vsyncadd [#allocation3], %s48
      %s50 = sshll.u32 [#allocation2], 4
      %s51 = int_to_ptr.vmem [resolvable:$true] %s50
      %56 = dma.vmem_to_hbm [thread:$0]  %s51, 256, %s3, [#allocation3], 128, 128, 8
    $region17: #{rope_pallas.1} parent=1 // pred_fallthru
      _
    // Predicated region
    $region18: #{rope_pallas.1} parent=1 // pred_check
      _
    $region19: #{rope_pallas.1} parent=1 // pred_check_branch
      %58 = sbr.rel (0) target = $region21
    $region20: #{rope_pallas.1} parent=1 // pred_region
      %59 = dma.done [#allocation3], 256
    $region21: #{rope_pallas.1} parent=1 // pred_fallthru
      _
    %60 = vsyncpa [#allocation3], 1

</llo_original>
